<compile_context>
chip_gen: v7x
topology: tpu7x:2x2x1
jax: 0.10.0
libtpu: 0.0.40
codegen_flags: <defaults>
</compile_context>

<pallas_src>
import functools

import jax
import jax.numpy as jnp
from jax.experimental import pallas as pl
from jax.experimental.pallas import tpu as pltpu


# ------------------------------ Pallas kernel ------------------------------

def _fused_conv_bn_kernel(pt_ref, wt_ref, gamma_ref, beta_ref, o_ref, *,
                          eps, m_valid):
    # pt_ref:    (K, M)      bf16   im2col patches, transposed (lane dim = M)
    # wt_ref:    (C_out, K)  bf16   conv weight, transposed
    # gamma_ref: (C_out, 1)  f32
    # beta_ref:  (C_out, 1)  f32
    # o_ref:     (C_out, M)  f32    lane-dense output
    y = jnp.dot(wt_ref[...], pt_ref[...],
                preferred_element_type=jnp.float32)          # (C_out, M) on MXU

    inv_m = 1.0 / m_valid
    mean = jnp.sum(y, axis=-1, keepdims=True) * inv_m        # lane reduce (XLU)
    yc = y - mean
    var = jnp.sum(yc * yc, axis=-1, keepdims=True) * inv_m   # biased var (PyTorch fwd)
    scale = jax.lax.rsqrt(var + eps) * gamma_ref[...]
    o_ref[...] = yc * scale + beta_ref[...]


# -------------------------------- wrappers ---------------------------------

def _im2col_t(x_nhwc, kh, kw, s, p):
    """im2col producing patches already transposed to (K, M).

    K is ordered (kh, kw, C_in); M is ordered (N, H_out, W_out).
    """
    N, H, W, C = x_nhwc.shape
    xp = jnp.pad(x_nhwc, ((0, 0), (p, p), (p, p), (0, 0)))
    Ho = (H + 2 * p - kh) // s + 1
    Wo = (W + 2 * p - kw) // s + 1
    cols = []
    for i in range(kh):
        for j in range(kw):
            cols.append(xp[:, i:i + (Ho - 1) * s + 1:s,
                           j:j + (Wo - 1) * s + 1:s, :])      # (N, Ho, Wo, C)
    pt = jnp.stack(cols, axis=0)                              # (kh*kw, N, Ho, Wo, C)
    pt = jnp.transpose(pt, (0, 4, 1, 2, 3))                   # (kh*kw, C, N, Ho, Wo)
    pt = pt.reshape(kh * kw * C, N * Ho * Wo)                 # (K, M)
    return pt, Ho, Wo


def conv_block_forward(x_nchw, w_oihw, conv_bias, gamma, beta, *, stride=1,
                       padding=0, eps=1e-5):
    """Conv2d(stride, padding) + BatchNorm2d (training-mode stats). NCHW in/out."""
    # The conv bias is a per-channel constant; training-mode BN subtracts the
    # per-channel mean immediately after, so the bias cancels exactly.
    del conv_bias

    N, Cin, H, W = x_nchw.shape
    Cout, _, kh, kw = w_oihw.shape

    x_nhwc = jnp.transpose(x_nchw, (0, 2, 3, 1))
    pt, Ho, Wo = _im2col_t(x_nhwc, kh, kw, stride, padding)
    M = N * Ho * Wo
    K = kh * kw * Cin

    # Weight (O, I, kh, kw) -> (O, kh, kw, I) -> (C_out, K); K order matches pt.
    wt = jnp.transpose(w_oihw, (0, 2, 3, 1)).reshape(Cout, K)

    # bf16 MXU operands (native on v5e/v6e/v7x); stats / normalization in f32.
    pt_bf = pt.astype(jnp.bfloat16)
    wt_bf = wt.astype(jnp.bfloat16)

    y_cm = pl.pallas_call(
        functools.partial(_fused_conv_bn_kernel, eps=eps, m_valid=float(M)),
        out_shape=jax.ShapeDtypeStruct((Cout, M), jnp.float32),
        # Single step: every operand fits VMEM (pt ~K*M*2 B, out ~Cout*M*4 B).
        in_specs=[
            pl.BlockSpec(memory_space=pltpu.MemorySpace.VMEM),
            pl.BlockSpec(memory_space=pltpu.MemorySpace.VMEM),
            pl.BlockSpec(memory_space=pltpu.MemorySpace.VMEM),
            pl.BlockSpec(memory_space=pltpu.MemorySpace.VMEM),
        ],
        out_specs=pl.BlockSpec(memory_space=pltpu.MemorySpace.VMEM),
    )(pt_bf, wt_bf, gamma.reshape(Cout, 1).astype(jnp.float32),
      beta.reshape(Cout, 1).astype(jnp.float32))

    y = y_cm.reshape(Cout, N, Ho, Wo)
    return jnp.transpose(y, (1, 0, 2, 3))                     # back to NCHW


# -------------------------------- reference ---------------------------------

def _reference(x_nchw, w, b, gamma, beta, stride, padding, eps=1e-5):
    y = jax.lax.conv_general_dilated(
        x_nchw, w, window_strides=(stride, stride),
        padding=[(padding, padding), (padding, padding)],
        dimension_numbers=("NCHW", "OIHW", "NCHW"))
    y = y + b.reshape(1, -1, 1, 1)
    mean = y.mean(axis=(0, 2, 3), keepdims=True)
    var = y.var(axis=(0, 2, 3), keepdims=True)
    return (y - mean) / jnp.sqrt(var + eps) * gamma.reshape(1, -1, 1, 1) \
        + beta.reshape(1, -1, 1, 1)


# ----------------------------------- main ------------------------------------

if __name__ == "__main__":
    # ConvBlock(in_c=4, out_c=8, k=3, s=1, p=1)
    N, Cin, H, W = 2, 4, 16, 16
    Cout, k, s, p = 8, 3, 1, 1

    key = jax.random.PRNGKey(0)
    kx, kw_, kb, kg, kbeta = jax.random.split(key, 5)

    x = jax.random.normal(kx, (N, Cin, H, W), dtype=jnp.float32)
    w = jax.random.normal(kw_, (Cout, Cin, k, k), dtype=jnp.float32) * 0.1
    b = jax.random.normal(kb, (Cout,), dtype=jnp.float32) * 0.1
    gamma = jnp.ones((Cout,), dtype=jnp.float32) + 0.1 * jax.random.normal(kg, (Cout,))
    beta = 0.1 * jax.random.normal(kbeta, (Cout,), dtype=jnp.float32)

    out = conv_block_forward(x, w, b, gamma, beta, stride=s, padding=p)
    out = jax.block_until_ready(out)

    ref = _reference(x, w, b, gamma, beta, s, p)
    assert out.shape == (N, Cout, H, W), out.shape
    # Tolerance covers bf16 MXU operands (f32 accumulation, f32 BN math).
    assert jnp.allclose(out, ref, atol=2e-2, rtol=2e-2), \
        float(jnp.max(jnp.abs(out - ref)))

    print("KERNEL_OK")
</pallas_src>

<mosaic_0001>
module attributes {stable_mosaic.version = 11 : i64} {
  func.func @_fused_conv_bn_kernel(%arg0: memref<36x512xbf16, #tpu.memory_space<vmem>>, %arg1: memref<8x36xbf16, #tpu.memory_space<vmem>>, %arg2: memref<8x1xf32, #tpu.memory_space<vmem>>, %arg3: memref<8x1xf32, #tpu.memory_space<vmem>>, %arg4: memref<8x512xf32, #tpu.memory_space<vmem>>) attributes {dimension_semantics = [], scalar_prefetch = 0 : i64, scratch_operands = 0 : i64, tpu.core_type = #tpu.core_type<tc>} {
    %c0 = arith.constant 0 : index
    %c0_0 = arith.constant 0 : index
    %0 = vector.load %arg1[%c0, %c0_0] : memref<8x36xbf16, #tpu.memory_space<vmem>>, vector<8x36xbf16>
    %c0_1 = arith.constant 0 : index
    %c0_2 = arith.constant 0 : index
    %1 = vector.load %arg0[%c0_1, %c0_2] : memref<36x512xbf16, #tpu.memory_space<vmem>>, vector<36x512xbf16>
    %cst = arith.constant dense<0.000000e+00> : vector<8x512xf32>
    %2 = tpu.matmul %0, %1, %cst {dimension_numbers = #tpu.dot_dimension_numbers<[1], [0], [0], [1], [0, 0, 1, 1], [], []>} : vector<8x36xbf16>, vector<36x512xbf16>, vector<8x512xf32> -> vector<8x512xf32>
    %cst_3 = arith.constant dense<0.000000e+00> : vector<8xf32>
    %3 = vector.multi_reduction <add>, %2, %cst_3 [1] : vector<8x512xf32> to vector<8xf32>
    %4 = vector.shape_cast %3 : vector<8xf32> to vector<8x1xf32>
    %cst_4 = arith.constant 0.001953125 : f32
    %5 = vector.broadcast %cst_4 : f32 to vector<8x1xf32>
    %6 = arith.mulf %4, %5 : vector<8x1xf32>
    %7 = vector.broadcast %6 : vector<8x1xf32> to vector<8x512xf32>
    %8 = arith.subf %2, %7 : vector<8x512xf32>
    %9 = arith.mulf %8, %8 : vector<8x512xf32>
    %cst_5 = arith.constant dense<0.000000e+00> : vector<8xf32>
    %10 = vector.multi_reduction <add>, %9, %cst_5 [1] : vector<8x512xf32> to vector<8xf32>
    %11 = vector.shape_cast %10 : vector<8xf32> to vector<8x1xf32>
    %cst_6 = arith.constant 0.001953125 : f32
    %12 = vector.broadcast %cst_6 : f32 to vector<8x1xf32>
    %13 = arith.mulf %11, %12 : vector<8x1xf32>
    %cst_7 = arith.constant 9.99999974E-6 : f32
    %14 = vector.broadcast %cst_7 : f32 to vector<8x1xf32>
    %15 = arith.addf %13, %14 : vector<8x1xf32>
    %16 = math.rsqrt %15 : vector<8x1xf32>
    %c0_8 = arith.constant 0 : index
    %c0_9 = arith.constant 0 : index
    %17 = vector.load %arg2[%c0_8, %c0_9] : memref<8x1xf32, #tpu.memory_space<vmem>>, vector<8x1xf32>
    %18 = arith.mulf %16, %17 : vector<8x1xf32>
    %19 = vector.broadcast %18 : vector<8x1xf32> to vector<8x512xf32>
    %20 = arith.mulf %8, %19 : vector<8x512xf32>
    %c0_10 = arith.constant 0 : index
    %c0_11 = arith.constant 0 : index
    %21 = vector.load %arg3[%c0_10, %c0_11] : memref<8x1xf32, #tpu.memory_space<vmem>>, vector<8x1xf32>
    %22 = vector.broadcast %21 : vector<8x1xf32> to vector<8x512xf32>
    %23 = arith.addf %20, %22 : vector<8x512xf32>
    %c0_12 = arith.constant 0 : index
    %c0_13 = arith.constant 0 : index
    %24 = vector.load %arg4[%c0_12, %c0_13] : memref<8x512xf32, #tpu.memory_space<vmem>>, vector<8x512xf32>
    tpu.vector_store %arg4[%c0_12, %c0_13], %23 {strides = array<i32>} : memref<8x512xf32, #tpu.memory_space<vmem>>, vector<8x512xf32>,
    return
  }
}

</mosaic_0001>

<llo_original>
// kernel: tpu_custom_call.1
$region0: #{tpu_custom_call.1}
  #allocation0 [shape = 'u32[]', space=smem, size = 0x4, offset = 0x4, fixed_abs, tag = 'smem constant byte address 0x4 - core index']
  #allocation1 [shape = 'u32[144,128]{1,0:T(1,128)}', space=vmem, size = 0x12000, scoped, tag = 'internal scratch']
  %s0 = inlined_call_operand.hbm [shape: bf16[36,512], index: 0, kind: input, shape index: {}]
  %s1 = inlined_call_operand.vmem [shape: bf16[8,36], index: 1, kind: input, shape index: {}]
  %s2 = inlined_call_operand.vmem [shape: f32[8,1], index: 2, kind: input, shape index: {}]
  %s3 = inlined_call_operand.vmem [shape: f32[8,1], index: 3, kind: input, shape index: {}]
  %s4 = inlined_call_operand.hbm [shape: f32[8,512], index: 4, kind: output, shape index: {}]
  %s5 = sld [smem:[#allocation0]]
  $region30: #{tpu_custom_call.1} parent=0
    _
  %s7 = ssub.s32 1, %s5
  %s8 = scalar_select 0, %s7, %s5
  $region1: #{tpu_custom_call.1} parent=0
    #allocation2 [shape = 'u8[40960]{0}', space=vmem, size = 0xa000, scoped, tag = 'input window, operand 0, single buffered']
    #allocation3 [shape = 's32[1]{0}', space=sflag, size = 0x4, scoped, tag = 'scoped memory for tpu_custom_call.1']
    #allocation4 [shape = 's32[1]{0}', space=sflag, size = 0x4, scoped, tag = 'scoped memory for tpu_custom_call.1']
    #allocation5 [shape = 'u8[16384]{0}', space=vmem, size = 0x4000, scoped, tag = 'output window, operand 0, single buffered']
    %9 = vsyncpa [#allocation3], 0
    %10 = vsyncpa [#allocation4], 0
    // Predicated region
    $region2: #{tpu_custom_call.1} parent=1 // pred_check
      _
    $region3: #{tpu_custom_call.1} parent=1 // pred_check_branch
      %12 = sbr.rel (0) target = $region5
    $region4: #{tpu_custom_call.1} parent=1 // pred_region
      %s14 = ssub.s32 1280, 1280
      %15 = vsyncadd [#allocation3], %s14
      %s16 = sshll.u32 [#allocation2], 4
      %s17 = int_to_ptr.vmem [resolvable:$true] %s16
      %22 = dma.hbm_to_vmem [thread:$0]  %s0, 1280, %s17, [#allocation3], 256, 256, 16
    $region5: #{tpu_custom_call.1} parent=1 // pred_fallthru
      _
    // Predicated region
    $region6: #{tpu_custom_call.1} parent=1 // pred_check
      _
    $region7: #{tpu_custom_call.1} parent=1 // pred_check_branch
      %24 = sbr.rel (0) target = $region9
    $region8: #{tpu_custom_call.1} parent=1 // pred_region
      _
    $region9: #{tpu_custom_call.1} parent=1 // pred_fallthru
      _
    // Predicated region
    $region10: #{tpu_custom_call.1} parent=1 // pred_check
      _
    $region11: #{tpu_custom_call.1} parent=1 // pred_check_branch
      %26 = sbr.rel (0) target = $region13
    $region12: #{tpu_custom_call.1} parent=1 // pred_region
      _
    $region13: #{tpu_custom_call.1} parent=1 // pred_fallthru
      _
    // Predicated region
    $region14: #{tpu_custom_call.1} parent=1 // pred_check
      _
    $region15: #{tpu_custom_call.1} parent=1 // pred_check_branch
      %28 = sbr.rel (0) target = $region17
    $region16: #{tpu_custom_call.1} parent=1 // pred_region
      _
    $region17: #{tpu_custom_call.1} parent=1 // pred_fallthru
      _
    // Predicated region
    $region18: #{tpu_custom_call.1} parent=1 // pred_check
      _
    $region19: #{tpu_custom_call.1} parent=1 // pred_check_branch
      %30 = sbr.rel (0) target = $region21
    $region20: #{tpu_custom_call.1} parent=1 // pred_region
      %31 = dma.done [#allocation3], 1280
    $region21: #{tpu_custom_call.1} parent=1 // pred_fallthru
      _
    %v33 = vld [vmem:[%s1] sm:$0xf]
    %v34 = vld [vmem:[#allocation2] sm:$0xff]
    %v35 = vld [vmem:[#allocation2 + $0x8] sm:$0xff]
    %v36 = vld [vmem:[#allocation2 + $0x10] sm:$0xff]
    %v37 = vld [vmem:[#allocation2 + $0x18] sm:$0xff]
    %v38 = vld [vmem:[#allocation2 + $0x20] sm:$0xff]
    %v39 = vld [vmem:[#allocation2 + $0x28] sm:$0xff]
    %v40 = vld [vmem:[#allocation2 + $0x30] sm:$0xff]
    %v41 = vld [vmem:[#allocation2 + $0x38] sm:$0xff]
    %v42 = vld [vmem:[#allocation2 + $0x40] sm:$0x33]
    %v43 = vld [vmem:[#allocation2 + $0x48] sm:$0x33]
    %v54 = vunpack.c.l.b16 %v34
    %v55 = vunpack.c.h.b16 %v34
    %v56 = vunpack.c.l.b16 %v35
    %v57 = vunpack.c.h.b16 %v35
    %v58 = vunpack.c.l.b16 %v36
    %v59 = vunpack.c.h.b16 %v36
    %v60 = vunpack.c.l.b16 %v37
    %v61 = vunpack.c.h.b16 %v37
    %v62 = vunpack.c.l.b16 %v38
    %v63 = vunpack.c.h.b16 %v38
    %v64 = vunpack.c.l.b16 %v39
    %v65 = vunpack.c.h.b16 %v39
    %v66 = vunpack.c.l.b16 %v40
    %v67 = vunpack.c.h.b16 %v40
    %v68 = vunpack.c.l.b16 %v41
    %v69 = vunpack.c.h.b16 %v41
    %v70 = vunpack.c.l.b16 %v42
    %v71 = vunpack.c.h.b16 %v42
    %v72 = vunpack.c.l.b16 %v43
    %v73 = vunpack.c.h.b16 %v43
    %v74 = vpack.c.b16 %v58, %v54
    %v75 = vpack.c.b16 %v59, %v55
    %v76 = vpack.c.b16 %v60, %v56
    %v77 = vpack.c.b16 %v61, %v57
    %v78 = vpack.c.b16 %v66, %v62
    %v79 = vpack.c.b16 %v67, %v63
    %v80 = vpack.c.b16 %v68, %v64
    %v81 = vpack.c.b16 %v69, %v65
    %v82 = vpack.c.b16 %v70, %v70
    %v83 = vpack.c.b16 %v71, %v71
    %v84 = vpack.c.b16 %v72, %v72
    %v85 = vpack.c.b16 %v73, %v73
    %vm94 = vcmask 293888
    %v96 = vsel %vm94, %v33, 0
    %vm98 = vcmask 1041408
    %v100 = vsel %vm98, %v82, 0
    %v103 = vsel %vm98, %v83, 0
    %v106 = vsel %vm98, %v84, 0
    %v109 = vsel %vm98, %v85, 0
    %111 = vmatprep.subr.bf16.mxu0 %v75
    %112 = vmatpush1.bf16.msra.mxu0 %v74
    %113 = vmatprep.subr.bf16.mxu0 %v79
    %114 = vmatpush1.bf16.msra.mxu0 %v78
    %115 = vmatprep.subr.bf16.mxu0 %v103
    %116 = vmatpush1.bf16.msra.mxu0 %v100
    %117 = vmatprep.subr.bf16.mxu0 0
    %118 = vmatpush1.bf16.msra.mxu0 0
    %119 = vmatprep.subr.bf16.mxu0 0
    %120 = vmatpush1.bf16.msra.mxu0 0
    %121 = vmatprep.subr.bf16.mxu0 0
    %122 = vmatpush1.bf16.msra.mxu0 0
    %123 = vmatprep.subr.bf16.mxu0 0
    %124 = vmatpush1.bf16.msra.mxu0 0
    %125 = vmatprep.subr.bf16.mxu0 0
    %126 = vmatpush1.bf16.msra.mxu0 0
    %127 = vmatprep.subr.bf16.mxu0 0
    %128 = vmatpush1.bf16.msra.mxu0 0
    %129 = vmatprep.subr.bf16.mxu0 0
    %130 = vmatpush1.bf16.msra.mxu0 0
    %131 = vmatprep.subr.bf16.mxu0 0
    %132 = vmatpush1.bf16.msra.mxu0 0
    %133 = vmatprep.subr.bf16.mxu0 0
    %134 = vmatpush1.bf16.msra.mxu0 0
    %135 = vmatprep.subr.bf16.mxu0 0
    %136 = vmatpush1.bf16.msra.mxu0 0
    %137 = vmatprep.subr.bf16.mxu0 0
    %138 = vmatpush1.bf16.msra.mxu0 0
    %139 = vmatprep.subr.bf16.mxu0 0
    %140 = vmatpush1.bf16.msra.mxu0 0
    %141 = vmatprep.subr.bf16.mxu0 0
    %142 = vmatpush1.bf16.msra.mxu0 0
    %143 = vmatprep.mubr.bf16.mxu0 0
    %144 = vmatmul.mubr.bf16.gmra.mrb[0].mxu0 %v96
    %v145 = vpop.f32.mrb[0].mxu0
    %v146 = vadd.f32 0.0, %v145
    %v147 = vpop.f32.mrb[0].mxu0
    %v148 = vadd.f32 0.0, %v147
    %v149 = vpop.f32.mrb[0].mxu0
    %v150 = vpop.f32.mrb[0].mxu0
    %151 = vdwg.mxu0
    %152 = vmatprep.subr.bf16.mxu0 %v77
    %153 = vmatpush1.bf16.msra.mxu0 %v76
    %154 = vmatprep.subr.bf16.mxu0 %v81
    %155 = vmatpush1.bf16.msra.mxu0 %v80
    %156 = vmatprep.subr.bf16.mxu0 %v109
    %157 = vmatpush1.bf16.msra.mxu0 %v106
    %158 = vmatprep.subr.bf16.mxu0 0
    %159 = vmatpush1.bf16.msra.mxu0 0
    %160 = vmatprep.subr.bf16.mxu0 0
    %161 = vmatpush1.bf16.msra.mxu0 0
    %162 = vmatprep.subr.bf16.mxu0 0
    %163 = vmatpush1.bf16.msra.mxu0 0
    %164 = vmatprep.subr.bf16.mxu0 0
    %165 = vmatpush1.bf16.msra.mxu0 0
    %166 = vmatprep.subr.bf16.mxu0 0
    %167 = vmatpush1.bf16.msra.mxu0 0
    %168 = vmatprep.subr.bf16.mxu0 0
    %169 = vmatpush1.bf16.msra.mxu0 0
    %170 = vmatprep.subr.bf16.mxu0 0
    %171 = vmatpush1.bf16.msra.mxu0 0
    %172 = vmatprep.subr.bf16.mxu0 0
    %173 = vmatpush1.bf16.msra.mxu0 0
    %174 = vmatprep.subr.bf16.mxu0 0
    %175 = vmatpush1.bf16.msra.mxu0 0
    %176 = vmatprep.subr.bf16.mxu0 0
    %177 = vmatpush1.bf16.msra.mxu0 0
    %178 = vmatprep.subr.bf16.mxu0 0
    %179 = vmatpush1.bf16.msra.mxu0 0
    %180 = vmatprep.subr.bf16.mxu0 0
    %181 = vmatpush1.bf16.msra.mxu0 0
    %182 = vmatprep.subr.bf16.mxu0 0
    %183 = vmatpush1.bf16.msra.mxu0 0
    %184 = vmatprep.mubr.bf16.mxu0 0
    %185 = vmatmul.mubr.bf16.gmra.mrb[0].mxu0 %v96
    %v186 = vpop.f32.mrb[0].mxu0
    %v187 = vadd.f32 0.0, %v186
    %v188 = vpop.f32.mrb[0].mxu0
    %v189 = vadd.f32 0.0, %v188
    %v190 = vpop.f32.mrb[0].mxu0
    %v191 = vpop.f32.mrb[0].mxu0
    %192 = vdwg.mxu0
    %v193 = vadd.f32 %v146, %v148
    %v194 = vadd.f32 %v193, %v187
    %v195 = vadd.f32 %v194, %v189
    %196 = vadd.xlane.f32.xlu0 %v195
    %v197 = vpop.xlane.xlu0 %196
    %v198 = vmul.f32 %v197, 0.001953125
    %v199 = vsub.f32 %v146, %v198
    %v200 = vsub.f32 %v148, %v198
    %v201 = vsub.f32 %v187, %v198
    %v202 = vsub.f32 %v189, %v198
    %v203 = vmul.f32 %v199, %v199
    %v204 = vmul.f32 %v200, %v200
    %v205 = vmul.f32 %v201, %v201
    %v206 = vmul.f32 %v202, %v202
    %v207 = vadd.f32 %v203, %v204
    %v208 = vadd.f32 %v207, %v205
    %v209 = vadd.f32 %v208, %v206
    %210 = vadd.xlane.f32.xlu0 %v209
    %v211 = vpop.xlane.xlu0 %210
    %v212 = vmul.f32 %v211, 0.001953125
    %v213 = vadd.f32 %v212, 1e-05
    %v214 = vrsqrt.pop %v213
    %v215 = vld [vmem:[%s2] sm:$0xff]
    %v216 = vmul.f32 %v214, %v215
    %218 = vset.pattern.permute.xlu0 0
    %219 = vperm.xlu0 %218, %v216
    %v220 = vpop.permute.xlu0 %219
    %v222 = vmul.f32 %v199, %v220
    %v223 = vmul.f32 %v200, %v220
    %v224 = vmul.f32 %v201, %v220
    %v225 = vmul.f32 %v202, %v220
    %v226 = vld [vmem:[%s3] sm:$0xff]
    %228 = vset.pattern.permute.xlu0 0
    %229 = vperm.xlu0 %228, %v226
    %v230 = vpop.permute.xlu0 %229
    %v232 = vadd.f32 %v222, %v230
    %v233 = vadd.f32 %v223, %v230
    %v234 = vadd.f32 %v224, %v230
    %v235 = vadd.f32 %v225, %v230
    %236 = vst [vmem:[#allocation5] sm:$0xff] %v232
    %237 = vst [vmem:[#allocation5 + $0x8] sm:$0xff] %v233
    %238 = vst [vmem:[#allocation5 + $0x10] sm:$0xff] %v234
    %239 = vst [vmem:[#allocation5 + $0x18] sm:$0xff] %v235
    // Predicated region
    $region22: #{tpu_custom_call.1} parent=1 // pred_check
      _
    $region23: #{tpu_custom_call.1} parent=1 // pred_check_branch
      %241 = sbr.rel (0) target = $region25
    $region24: #{tpu_custom_call.1} parent=1 // pred_region
      %s243 = ssub.s32 512, 512
      %244 = vsyncadd [#allocation4], %s243
      %s246 = sshll.u32 [#allocation5], 4
      %s247 = int_to_ptr.vmem [resolvable:$true] %s246
      %249 = dma.vmem_to_hbm [thread:$0]  %s247, 512, %s4, [#allocation4]
    $region25: #{tpu_custom_call.1} parent=1 // pred_fallthru
      _
    // Predicated region
    $region26: #{tpu_custom_call.1} parent=1 // pred_check
      _
    $region27: #{tpu_custom_call.1} parent=1 // pred_check_branch
      %251 = sbr.rel (0) target = $region29
    $region28: #{tpu_custom_call.1} parent=1 // pred_region
      %252 = dma.done [#allocation4], 512
    $region29: #{tpu_custom_call.1} parent=1 // pred_fallthru
      _
    %253 = vsyncpa [#allocation3], 1
    %254 = vsyncpa [#allocation4], 1

</llo_original>
